<compile_context>
chip_gen: v7x
topology: tpu7x:2x2x1
jax: 0.10.0
libtpu: 0.0.40
codegen_flags: <defaults>
</compile_context>

<pallas_src>
import functools

import jax
import jax.numpy as jnp
import numpy as np
from jax.experimental import pallas as pl
from jax.experimental.pallas import tpu as pltpu


def basic_block_kernel(xext_ref, mask_ref, w1_ref, b1_ref, w2_ref, b2_ref,
                       out_ref, *, H, W):
    # xext_ref : (1, Cin, Lext) f32   flattened zero-padded input (rows padded by 5,
    #                                 cols padded by 2, spatial flattened onto lanes)
    # mask_ref : (1, LM) f32          1.0 on the valid HxW interior of the mid frame
    # w1_ref   : (Cmid, 9*Cin) bf16   conv1 im2col weights (BN1 scale pre-folded)
    # b1_ref   : (Cmid, 1) f32        folded BN1 bias
    # w2_ref   : (Cout, 9*Cmid) bf16  conv2 im2col weights (BN2 scale pre-folded)
    # b2_ref   : (Cout, 1) f32        folded BN2 bias
    # out_ref  : (1, Cout, H*W) f32   lane-dense output slab
    Hp2, Wp2 = H + 4, W + 4
    L = Hp2 * Wp2              # flat padded-frame length (image + 2-pixel zero ring)
    EXT = Wp2 + 1              # max |tap shift| in the flat frame
    LM = L + 2 * EXT           # length of the conv1 output ("mid") frame
    OFF = 3 * Wp2              # flat offset of padded-frame (0,0) inside xext

    xext = xext_ref[0]         # (Cin, Lext)

    # Flat-frame shift of conv tap (kh, kw); order matches the HWIO weight reshape.
    shifts = [(kh - 1) * Wp2 + (kw - 1) for kh in range(3) for kw in range(3)]

    # ---- conv1 (BN1 scale folded into w1): one im2col matmul, K = 9*Cin ----------
    p1 = jnp.concatenate(
        [xext[:, OFF - EXT + s: OFF - EXT + s + LM] for s in shifts], axis=0)
    acc1 = jnp.dot(w1_ref[...], p1.astype(jnp.bfloat16),
                   preferred_element_type=jnp.float32)          # (Cmid, LM) f32

    # BN1 bias + ReLU; the mask multiply zeroes everything outside the valid HxW
    # interior, which is exactly conv2's zero-padding ring (and kills out-of-image
    # "halo" conv values and flat-frame row-wrap garbage).
    mid = jnp.maximum(acc1 + b1_ref[...], 0.0) * mask_ref[...]

    # ---- conv2 (BN2 scale folded into w2): one im2col matmul, K = 9*Cmid ---------
    p2 = jnp.concatenate(
        [mid[:, EXT + s: EXT + s + L] for s in shifts], axis=0)
    acc2 = jnp.dot(w2_ref[...], p2.astype(jnp.bfloat16),
                   preferred_element_type=jnp.float32)          # (Cout, L) f32

    # BN2 bias + residual add + ReLU (f32 epilogue, lane-dense, no reshapes).
    identity = xext[:, OFF: OFF + L]                            # Cin == Cout
    y = jnp.maximum(acc2 + b2_ref[...] + identity, 0.0)

    # Gather the HxW interior rows into a dense (Cout, H*W) slab (pure lane slices +
    # lane concat; no lane-dim reshape needed) -> single unmasked lane-dense store.
    rows = [y[:, (2 + h) * Wp2 + 2: (2 + h) * Wp2 + 2 + W] for h in range(H)]
    out_ref[0] = jnp.concatenate(rows, axis=1)


@jax.jit
def basic_block_forward(x_nchw, w1_hwio, g1, be1, m1, v1,
                        w2_hwio, g2, be2, m2, v2, eps=1e-5):
    """Fused BasicBlock forward (stride=1, downsample=None), NCHW in / NCHW out."""
    N, Cin, H, W = x_nchw.shape
    Cmid = w1_hwio.shape[3]
    Cout = w2_hwio.shape[3]
    Hp2, Wp2 = H + 4, W + 4
    L = Hp2 * Wp2
    EXT = Wp2 + 1
    LM = L + 2 * EXT
    Lext = (H + 10) * Wp2

    # Zero-pad rows by 5 and cols by 2 so every shifted im2col lane-slice stays in
    # bounds, then flatten the spatial dims onto the lane axis.  NCHW needs no
    # transpose for this channels-on-sublanes layout.
    x_ext = jnp.pad(x_nchw.astype(jnp.float32),
                    ((0, 0), (0, 0), (5, 5), (2, 2))).reshape(N, Cin, Lext)

    # 0/1 interior mask on the conv1-output ("mid") frame.
    m2d = jnp.zeros((Hp2, Wp2), jnp.float32).at[2:2 + H, 2:2 + W].set(1.0)
    mask = jnp.pad(m2d.reshape(-1), (EXT, EXT)).reshape(1, LM)

    # Fold eval-mode BN into the convs: the scale goes into the (linear) conv
    # weights, the bias stays as a per-channel (C, 1) add broadcasting along lanes.
    s1 = g1 * jax.lax.rsqrt(v1 + eps)
    b1 = (be1 - m1 * s1).reshape(Cmid, 1)
    s2 = g2 * jax.lax.rsqrt(v2 + eps)
    b2 = (be2 - m2 * s2).reshape(Cout, 1)

    # HWIO -> (Cout, 9*Cin) im2col weight matrices, BN scale folded, bf16 for MXU.
    w1m = (w1_hwio * s1[None, None, None, :]).reshape(9 * Cin, Cmid).T.astype(jnp.bfloat16)
    w2m = (w2_hwio * s2[None, None, None, :]).reshape(9 * Cmid, Cout).T.astype(jnp.bfloat16)

    kernel = functools.partial(basic_block_kernel, H=H, W=W)
    out = pl.pallas_call(
        kernel,
        out_shape=jax.ShapeDtypeStruct((N, Cout, H * W), jnp.float32),
        grid_spec=pltpu.PrefetchScalarGridSpec(
            num_scalar_prefetch=0,
            grid=(N,),
            in_specs=[
                pl.BlockSpec((1, Cin, Lext), lambda n: (n, 0, 0)),
                pl.BlockSpec((1, LM), lambda n: (0, 0)),
                pl.BlockSpec((Cmid, 9 * Cin), lambda n: (0, 0)),
                pl.BlockSpec((Cmid, 1), lambda n: (0, 0)),
                pl.BlockSpec((Cout, 9 * Cmid), lambda n: (0, 0)),
                pl.BlockSpec((Cout, 1), lambda n: (0, 0)),
            ],
            out_specs=pl.BlockSpec((1, Cout, H * W), lambda n: (n, 0, 0)),
        ),
        compiler_params=pltpu.CompilerParams(
            dimension_semantics=("parallel",),
            vmem_limit_bytes=32 * 1024 * 1024,  # per-step footprint << 1 MiB; safe on v7x (64 MiB/TC)
        ),
    )(x_ext, mask, w1m, b1, w2m, b2)

    return out.reshape(N, Cout, H, W)   # free (contiguous) reshape back to NCHW


def reference_basic_block(x, w1_hwio, g1, be1, m1, v1,
                          w2_hwio, g2, be2, m2, v2, eps=1e-5):
    """Pure-JAX reference (eval-mode BN), NCHW in/out."""
    def conv(inp, w):
        return jax.lax.conv_general_dilated(
            inp, w, window_strides=(1, 1), padding=((1, 1), (1, 1)),
            dimension_numbers=("NCHW", "HWIO", "NCHW"))

    def bn(t, g, b, m, v):
        sh = (1, -1, 1, 1)
        return (t - m.reshape(sh)) / jnp.sqrt(v.reshape(sh) + eps) * g.reshape(sh) + b.reshape(sh)

    out = jnp.maximum(bn(conv(x, w1_hwio), g1, be1, m1, v1), 0.0)
    out = bn(conv(out, w2_hwio), g2, be2, m2, v2)
    return jnp.maximum(out + x, 0.0)


if __name__ == "__main__":
    # Small shapes consistent with the module: BasicBlock(inplanes=8, planes=8, cfg=16)
    N, inplanes, H, W = 2, 8, 16, 16
    cfg = 16           # pruned width of the first conv
    planes = inplanes  # residual add with downsample=None requires planes == inplanes

    key = jax.random.PRNGKey(0)
    k = jax.random.split(key, 10)
    w1 = jax.random.normal(k[0], (3, 3, inplanes, cfg), jnp.float32) * 0.1
    w2 = jax.random.normal(k[1], (3, 3, cfg, planes), jnp.float32) * 0.1
    g1 = 1.0 + 0.1 * jax.random.normal(k[2], (cfg,), jnp.float32)
    be1 = 0.1 * jax.random.normal(k[3], (cfg,), jnp.float32)
    m1 = 0.05 * jax.random.normal(k[4], (cfg,), jnp.float32)
    v1 = 1.0 + 0.1 * jnp.abs(jax.random.normal(k[5], (cfg,), jnp.float32))
    g2 = 1.0 + 0.1 * jax.random.normal(k[6], (planes,), jnp.float32)
    be2 = 0.1 * jax.random.normal(k[7], (planes,), jnp.float32)
    m2 = 0.05 * jax.random.normal(k[8], (planes,), jnp.float32)
    v2 = 1.0 + 0.1 * jnp.abs(jax.random.normal(k[9], (planes,), jnp.float32))

    x = jax.random.normal(jax.random.PRNGKey(42), (N, inplanes, H, W), jnp.float32)

    out = jax.block_until_ready(
        basic_block_forward(x, w1, g1, be1, m1, v1, w2, g2, be2, m2, v2))
    ref = jax.block_until_ready(
        reference_basic_block(x, w1, g1, be1, m1, v1, w2, g2, be2, m2, v2))

    # bf16 MXU inputs (f32 accumulation / f32 epilogue) -> tolerance loosened vs. f32.
    np.testing.assert_allclose(np.asarray(out), np.asarray(ref), rtol=2e-2, atol=5e-2)
    print("KERNEL_OK")
</pallas_src>

<mosaic_0001>
module attributes {stable_mosaic.version = 11 : i64} {
  func.func @basic_block_kernel(%arg0: i32, %arg1: memref<1x8x520xf32, #tpu.memory_space<vmem>>, %arg2: memref<1x442xf32, #tpu.memory_space<vmem>>, %arg3: memref<16x72xbf16, #tpu.memory_space<vmem>>, %arg4: memref<16x1xf32, #tpu.memory_space<vmem>>, %arg5: memref<8x144xbf16, #tpu.memory_space<vmem>>, %arg6: memref<8x1xf32, #tpu.memory_space<vmem>>, %arg7: memref<1x8x256xf32, #tpu.memory_space<vmem>>) attributes {dimension_semantics = [#tpu.dimension_semantics<parallel>], iteration_bounds = array<i64: 2>, scalar_prefetch = 0 : i64, scratch_operands = 0 : i64, tpu.core_type = #tpu.core_type<tc>, window_params = [{transform_indices = @transform_0, window_bounds = array<i64: 1, 8, 520>}, {pipeline_mode = #tpu.pipeline_mode<synchronous>, transform_indices = @transform_1, window_bounds = array<i64: 1, 442>}, {pipeline_mode = #tpu.pipeline_mode<synchronous>, transform_indices = @transform_2, window_bounds = array<i64: 16, 72>}, {pipeline_mode = #tpu.pipeline_mode<synchronous>, transform_indices = @transform_3, window_bounds = array<i64: 16, 1>}, {pipeline_mode = #tpu.pipeline_mode<synchronous>, transform_indices = @transform_4, window_bounds = array<i64: 8, 144>}, {pipeline_mode = #tpu.pipeline_mode<synchronous>, transform_indices = @transform_5, window_bounds = array<i64: 8, 1>}, {transform_indices = @transform_6, window_bounds = array<i64: 1, 8, 256>}]} {
    %c0 = arith.constant 0 : index
    %c0_0 = arith.constant 0 : index
    %c0_1 = arith.constant 0 : index
    %0 = vector.load %arg1[%c0, %c0_0, %c0_1] : memref<1x8x520xf32, #tpu.memory_space<vmem>>, vector<1x8x520xf32>
    %1 = vector.shape_cast %0 : vector<1x8x520xf32> to vector<8x520xf32>
    %2 = vector.extract_strided_slice %1 {offsets = [0, 18], sizes = [8, 442], strides = [1, 1]} : vector<8x520xf32> to vector<8x442xf32>
    %3 = vector.extract_strided_slice %1 {offsets = [0, 19], sizes = [8, 442], strides = [1, 1]} : vector<8x520xf32> to vector<8x442xf32>
    %4 = vector.extract_strided_slice %1 {offsets = [0, 20], sizes = [8, 442], strides = [1, 1]} : vector<8x520xf32> to vector<8x442xf32>
    %5 = vector.extract_strided_slice %1 {offsets = [0, 38], sizes = [8, 442], strides = [1, 1]} : vector<8x520xf32> to vector<8x442xf32>
    %6 = vector.extract_strided_slice %1 {offsets = [0, 39], sizes = [8, 442], strides = [1, 1]} : vector<8x520xf32> to vector<8x442xf32>
    %7 = vector.extract_strided_slice %1 {offsets = [0, 40], sizes = [8, 442], strides = [1, 1]} : vector<8x520xf32> to vector<8x442xf32>
    %8 = vector.extract_strided_slice %1 {offsets = [0, 58], sizes = [8, 442], strides = [1, 1]} : vector<8x520xf32> to vector<8x442xf32>
    %9 = vector.extract_strided_slice %1 {offsets = [0, 59], sizes = [8, 442], strides = [1, 1]} : vector<8x520xf32> to vector<8x442xf32>
    %10 = vector.extract_strided_slice %1 {offsets = [0, 60], sizes = [8, 442], strides = [1, 1]} : vector<8x520xf32> to vector<8x442xf32>
    %11 = tpu.concatenate %2, %3, %4, %5, %6, %7, %8, %9, %10 in 0 : vector<8x442xf32>, vector<8x442xf32>, vector<8x442xf32>, vector<8x442xf32>, vector<8x442xf32>, vector<8x442xf32>, vector<8x442xf32>, vector<8x442xf32>, vector<8x442xf32> -> vector<72x442xf32>
    %c0_2 = arith.constant 0 : index
    %c0_3 = arith.constant 0 : index
    %12 = vector.load %arg3[%c0_2, %c0_3] : memref<16x72xbf16, #tpu.memory_space<vmem>>, vector<16x72xbf16>
    %13 = arith.truncf %11 : vector<72x442xf32> to vector<72x442xbf16>
    %cst = arith.constant dense<0.000000e+00> : vector<16x442xf32>
    %14 = tpu.matmul %12, %13, %cst {dimension_numbers = #tpu.dot_dimension_numbers<[1], [0], [0], [1], [0, 0, 1, 1], [], []>} : vector<16x72xbf16>, vector<72x442xbf16>, vector<16x442xf32> -> vector<16x442xf32>
    %c0_4 = arith.constant 0 : index
    %c0_5 = arith.constant 0 : index
    %15 = vector.load %arg4[%c0_4, %c0_5] : memref<16x1xf32, #tpu.memory_space<vmem>>, vector<16x1xf32>
    %16 = vector.broadcast %15 : vector<16x1xf32> to vector<16x442xf32>
    %17 = arith.addf %14, %16 : vector<16x442xf32>
    %cst_6 = arith.constant 0.000000e+00 : f32
    %18 = vector.broadcast %cst_6 : f32 to vector<16x442xf32>
    %19 = arith.maximumf %17, %18 : vector<16x442xf32>
    %c0_7 = arith.constant 0 : index
    %c0_8 = arith.constant 0 : index
    %20 = vector.load %arg2[%c0_7, %c0_8] : memref<1x442xf32, #tpu.memory_space<vmem>>, vector<1x442xf32>
    %21 = vector.broadcast %20 : vector<1x442xf32> to vector<16x442xf32>
    %22 = arith.mulf %19, %21 : vector<16x442xf32>
    %23 = vector.extract_strided_slice %22 {offsets = [0, 0], sizes = [16, 400], strides = [1, 1]} : vector<16x442xf32> to vector<16x400xf32>
    %24 = vector.extract_strided_slice %22 {offsets = [0, 1], sizes = [16, 400], strides = [1, 1]} : vector<16x442xf32> to vector<16x400xf32>
    %25 = vector.extract_strided_slice %22 {offsets = [0, 2], sizes = [16, 400], strides = [1, 1]} : vector<16x442xf32> to vector<16x400xf32>
    %26 = vector.extract_strided_slice %22 {offsets = [0, 20], sizes = [16, 400], strides = [1, 1]} : vector<16x442xf32> to vector<16x400xf32>
    %27 = vector.extract_strided_slice %22 {offsets = [0, 21], sizes = [16, 400], strides = [1, 1]} : vector<16x442xf32> to vector<16x400xf32>
    %28 = vector.extract_strided_slice %22 {offsets = [0, 22], sizes = [16, 400], strides = [1, 1]} : vector<16x442xf32> to vector<16x400xf32>
    %29 = vector.extract_strided_slice %22 {offsets = [0, 40], sizes = [16, 400], strides = [1, 1]} : vector<16x442xf32> to vector<16x400xf32>
    %30 = vector.extract_strided_slice %22 {offsets = [0, 41], sizes = [16, 400], strides = [1, 1]} : vector<16x442xf32> to vector<16x400xf32>
    %31 = vector.extract_strided_slice %22 {offsets = [0, 42], sizes = [16, 400], strides = [1, 1]} : vector<16x442xf32> to vector<16x400xf32>
    %32 = tpu.concatenate %23, %24, %25, %26, %27, %28, %29, %30, %31 in 0 : vector<16x400xf32>, vector<16x400xf32>, vector<16x400xf32>, vector<16x400xf32>, vector<16x400xf32>, vector<16x400xf32>, vector<16x400xf32>, vector<16x400xf32>, vector<16x400xf32> -> vector<144x400xf32>
    %c0_9 = arith.constant 0 : index
    %c0_10 = arith.constant 0 : index
    %33 = vector.load %arg5[%c0_9, %c0_10] : memref<8x144xbf16, #tpu.memory_space<vmem>>, vector<8x144xbf16>
    %34 = arith.truncf %32 : vector<144x400xf32> to vector<144x400xbf16>
    %cst_11 = arith.constant dense<0.000000e+00> : vector<8x400xf32>
    %35 = tpu.matmul %33, %34, %cst_11 {dimension_numbers = #tpu.dot_dimension_numbers<[1], [0], [0], [1], [0, 0, 1, 1], [], []>} : vector<8x144xbf16>, vector<144x400xbf16>, vector<8x400xf32> -> vector<8x400xf32>
    %36 = vector.extract_strided_slice %1 {offsets = [0, 60], sizes = [8, 400], strides = [1, 1]} : vector<8x520xf32> to vector<8x400xf32>
    %c0_12 = arith.constant 0 : index
    %c0_13 = arith.constant 0 : index
    %37 = vector.load %arg6[%c0_12, %c0_13] : memref<8x1xf32, #tpu.memory_space<vmem>>, vector<8x1xf32>
    %38 = vector.broadcast %37 : vector<8x1xf32> to vector<8x400xf32>
    %39 = arith.addf %35, %38 : vector<8x400xf32>
    %40 = arith.addf %39, %36 : vector<8x400xf32>
    %cst_14 = arith.constant 0.000000e+00 : f32
    %41 = vector.broadcast %cst_14 : f32 to vector<8x400xf32>
    %42 = arith.maximumf %40, %41 : vector<8x400xf32>
    %43 = vector.extract_strided_slice %42 {offsets = [0, 42], sizes = [8, 16], strides = [1, 1]} : vector<8x400xf32> to vector<8x16xf32>
    %44 = vector.extract_strided_slice %42 {offsets = [0, 62], sizes = [8, 16], strides = [1, 1]} : vector<8x400xf32> to vector<8x16xf32>
    %45 = vector.extract_strided_slice %42 {offsets = [0, 82], sizes = [8, 16], strides = [1, 1]} : vector<8x400xf32> to vector<8x16xf32>
    %46 = vector.extract_strided_slice %42 {offsets = [0, 102], sizes = [8, 16], strides = [1, 1]} : vector<8x400xf32> to vector<8x16xf32>
    %47 = vector.extract_strided_slice %42 {offsets = [0, 122], sizes = [8, 16], strides = [1, 1]} : vector<8x400xf32> to vector<8x16xf32>
    %48 = vector.extract_strided_slice %42 {offsets = [0, 142], sizes = [8, 16], strides = [1, 1]} : vector<8x400xf32> to vector<8x16xf32>
    %49 = vector.extract_strided_slice %42 {offsets = [0, 162], sizes = [8, 16], strides = [1, 1]} : vector<8x400xf32> to vector<8x16xf32>
    %50 = vector.extract_strided_slice %42 {offsets = [0, 182], sizes = [8, 16], strides = [1, 1]} : vector<8x400xf32> to vector<8x16xf32>
    %51 = vector.extract_strided_slice %42 {offsets = [0, 202], sizes = [8, 16], strides = [1, 1]} : vector<8x400xf32> to vector<8x16xf32>
    %52 = vector.extract_strided_slice %42 {offsets = [0, 222], sizes = [8, 16], strides = [1, 1]} : vector<8x400xf32> to vector<8x16xf32>
    %53 = vector.extract_strided_slice %42 {offsets = [0, 242], sizes = [8, 16], strides = [1, 1]} : vector<8x400xf32> to vector<8x16xf32>
    %54 = vector.extract_strided_slice %42 {offsets = [0, 262], sizes = [8, 16], strides = [1, 1]} : vector<8x400xf32> to vector<8x16xf32>
    %55 = vector.extract_strided_slice %42 {offsets = [0, 282], sizes = [8, 16], strides = [1, 1]} : vector<8x400xf32> to vector<8x16xf32>
    %56 = vector.extract_strided_slice %42 {offsets = [0, 302], sizes = [8, 16], strides = [1, 1]} : vector<8x400xf32> to vector<8x16xf32>
    %57 = vector.extract_strided_slice %42 {offsets = [0, 322], sizes = [8, 16], strides = [1, 1]} : vector<8x400xf32> to vector<8x16xf32>
    %58 = vector.extract_strided_slice %42 {offsets = [0, 342], sizes = [8, 16], strides = [1, 1]} : vector<8x400xf32> to vector<8x16xf32>
    %59 = tpu.concatenate %43, %44, %45, %46, %47, %48, %49, %50, %51, %52, %53, %54, %55, %56, %57, %58 in 1 : vector<8x16xf32>, vector<8x16xf32>, vector<8x16xf32>, vector<8x16xf32>, vector<8x16xf32>, vector<8x16xf32>, vector<8x16xf32>, vector<8x16xf32>, vector<8x16xf32>, vector<8x16xf32>, vector<8x16xf32>, vector<8x16xf32>, vector<8x16xf32>, vector<8x16xf32>, vector<8x16xf32>, vector<8x16xf32> -> vector<8x256xf32>
    %c0_15 = arith.constant 0 : index
    %c0_16 = arith.constant 0 : index
    %c0_17 = arith.constant 0 : index
    %60 = vector.load %arg7[%c0_15, %c0_16, %c0_17] : memref<1x8x256xf32, #tpu.memory_space<vmem>>, vector<1x8x256xf32>
    %61 = vector.shape_cast %60 : vector<1x8x256xf32> to vector<8x256xf32>
    %62 = vector.shape_cast %59 : vector<8x256xf32> to vector<1x8x256xf32>
    tpu.vector_store %arg7[%c0_15, %c0_16, %c0_17], %62 {strides = array<i32>} : memref<1x8x256xf32, #tpu.memory_space<vmem>>, vector<1x8x256xf32>,
    return
  }
  func.func @transform_0(%arg0: i32) -> (i32, i32, i32) {
    %c0_i32 = arith.constant 0 : i32
    %c0_i32_0 = arith.constant 0 : i32
    %c0_i32_1 = arith.constant 0 : i32
    return %arg0, %c0_i32, %c0_i32_0 : i32, i32, i32
  }
  func.func @transform_1(%arg0: i32) -> (i32, i32) {
    %c0_i32 = arith.constant 0 : i32
    %c0_i32_0 = arith.constant 0 : i32
    %c0_i32_1 = arith.constant 0 : i32
    return %c0_i32, %c0_i32_0 : i32, i32
  }
  func.func @transform_2(%arg0: i32) -> (i32, i32) {
    %c0_i32 = arith.constant 0 : i32
    %c0_i32_0 = arith.constant 0 : i32
    %c0_i32_1 = arith.constant 0 : i32
    return %c0_i32, %c0_i32_0 : i32, i32
  }
  func.func @transform_3(%arg0: i32) -> (i32, i32) {
    %c0_i32 = arith.constant 0 : i32
    %c0_i32_0 = arith.constant 0 : i32
    %c0_i32_1 = arith.constant 0 : i32
    return %c0_i32, %c0_i32_0 : i32, i32
  }
  func.func @transform_4(%arg0: i32) -> (i32, i32) {
    %c0_i32 = arith.constant 0 : i32
    %c0_i32_0 = arith.constant 0 : i32
    %c0_i32_1 = arith.constant 0 : i32
    return %c0_i32, %c0_i32_0 : i32, i32
  }
  func.func @transform_5(%arg0: i32) -> (i32, i32) {
    %c0_i32 = arith.constant 0 : i32
    %c0_i32_0 = arith.constant 0 : i32
    %c0_i32_1 = arith.constant 0 : i32
    return %c0_i32, %c0_i32_0 : i32, i32
  }
  func.func @transform_6(%arg0: i32) -> (i32, i32, i32) {
    %c0_i32 = arith.constant 0 : i32
    %c0_i32_0 = arith.constant 0 : i32
    %c0_i32_1 = arith.constant 0 : i32
    return %arg0, %c0_i32, %c0_i32_0 : i32, i32, i32
  }
}

</mosaic_0001>

<llo_original>
// kernel: basic_block_forward.1
$region0: #{basic_block_forward.1}
  #allocation0 [shape = 'u32[]', space=smem, size = 0x4, offset = 0x4, fixed_abs, tag = 'smem constant byte address 0x4 - core index']
  #allocation1 [shape = 'u32[144,128]{1,0:T(1,128)}', space=vmem, size = 0x12000, scoped, tag = 'internal scratch']
  %s0 = inlined_call_operand.vmem [shape: f32[2,8,520], index: 0, kind: input, shape index: {}]
  %s1 = inlined_call_operand.vmem [shape: f32[1,442], index: 1, kind: input, shape index: {}]
  %s2 = inlined_call_operand.vmem [shape: bf16[16,72], index: 2, kind: input, shape index: {}]
  %s3 = inlined_call_operand.vmem [shape: f32[16,1], index: 3, kind: input, shape index: {}]
  %s4 = inlined_call_operand.vmem [shape: bf16[8,144], index: 4, kind: input, shape index: {}]
  %s5 = inlined_call_operand.vmem [shape: f32[8,1], index: 5, kind: input, shape index: {}]
  %s6 = inlined_call_operand.vmem [shape: f32[2,8,256], index: 6, kind: output, shape index: {}]
  %s7 = sld [smem:[#allocation0]]
  $region57: #{basic_block_forward.1} parent=0
    _
  %s9 = ssub.s32 1, %s7
  %s10 = scalar_select 0, %s9, %s7
  loop: start=0, step=1, limit=4
  $region2: #{basic_block_forward.1} parent=0 // loop_pre_header
    _
  $region3: #{basic_block_forward.1} parent=0 // loop_header
    %s12 = sphi 0, %s16
    %p13 = scmp.ge.s32.totalorder %s12, 4
    %s22 = sphi 0, %s24
    %s25 = sphi 0, %s22
    %s26 = sphi 0, %s25
    %s42 = sphi 0, %s26
    %s46 = sphi 0, %s46
    %s48 = sphi 0, %s46
    %s49 = sphi 0, %s48
    %s63 = sphi 0, %s49
    %s67 = sphi 0, %s67
    %s69 = sphi 0, %s67
    %s70 = sphi 0, %s69
    %s84 = sphi 0, %s70
    %s88 = sphi 0, %s88
    %s90 = sphi 0, %s88
    %s91 = sphi 0, %s90
    %s105 = sphi 0, %s91
    %s109 = sphi 0, %s109
    %s111 = sphi 0, %s109
    %s112 = sphi 0, %s111
    %s126 = sphi 0, %s112
    %s130 = sphi 0, %s130
    %s132 = sphi 0, %s130
    %s133 = sphi 0, %s132
    %s147 = sphi 0, %s133
    %s153 = sphi 0, %s155
    %s156 = sphi 0, %s153
    %s157 = sphi 0, %s156
    %s173 = sphi 0, %s157
  $region4: #{basic_block_forward.1} parent=0 // loop_header_branch
    %15 = sbr.rel (%p13) target = $region8
  $region5: #{basic_block_forward.1} parent=0 // loop_body
    %s17 = ssub.s32 %s12, 1
    %s18 = ssub.s32 %s12, 2
    %s19 = sadd.s32 %s12, 1
    %s20 = ssub.s32 %s12, %s19
    %p21 = scmp.eq.s32.totalorder %s20, 0
    %s23 = sadd.s32 %s22, 1
    %s24 = scalar_select %p21, %s22, %s23
    %p27 = pneg %p21
    %p28 = scmp.eq.s32.totalorder %s12, 1
    %p29 = por %p27, %p28
    %p30 = scmp.ne.s32.totalorder %s22, %s25
    %p31 = scmp.eq.s32.totalorder %s12, 0
    %p32 = por %p30, %p31
    %p33 = scmp.ne.s32.totalorder %s22, %s25
    %p34 = scmp.eq.s32.totalorder %s17, 1
    %p35 = por %p33, %p34
    %p36 = scmp.ne.s32.totalorder %s25, %s26
    %p37 = scmp.eq.s32.totalorder %s17, 0
    %p38 = por %p36, %p37
    %p39 = scmp.ne.s32.totalorder %s25, %s26
    %p40 = scmp.eq.s32.totalorder %s18, 1
    %p41 = por %p39, %p40
    %p43 = scmp.ne.s32.totalorder %s26, %s42
    %p44 = scmp.eq.s32.totalorder %s18, 0
    %p45 = por %p43, %p44
    %s47 = sadd.s32 %s46, 1
    %p50 = scmp.eq.s32.totalorder %s12, 1
    %p51 = scmp.ne.s32.totalorder %s46, %s48
    %p52 = scmp.eq.s32.totalorder %s12, 0
    %p53 = por %p51, %p52
    %p54 = scmp.ne.s32.totalorder %s46, %s48
    %p55 = scmp.eq.s32.totalorder %s17, 1
    %p56 = por %p54, %p55
    %p57 = scmp.ne.s32.totalorder %s48, %s49
    %p58 = scmp.eq.s32.totalorder %s17, 0
    %p59 = por %p57, %p58
    %p60 = scmp.ne.s32.totalorder %s48, %s49
    %p61 = scmp.eq.s32.totalorder %s18, 1
    %p62 = por %p60, %p61
    %p64 = scmp.ne.s32.totalorder %s49, %s63
    %p65 = scmp.eq.s32.totalorder %s18, 0
    %p66 = por %p64, %p65
    %s68 = sadd.s32 %s67, 1
    %p71 = scmp.eq.s32.totalorder %s12, 1
    %p72 = scmp.ne.s32.totalorder %s67, %s69
    %p73 = scmp.eq.s32.totalorder %s12, 0
    %p74 = por %p72, %p73
    %p75 = scmp.ne.s32.totalorder %s67, %s69
    %p76 = scmp.eq.s32.totalorder %s17, 1
    %p77 = por %p75, %p76
    %p78 = scmp.ne.s32.totalorder %s69, %s70
    %p79 = scmp.eq.s32.totalorder %s17, 0
    %p80 = por %p78, %p79
    %p81 = scmp.ne.s32.totalorder %s69, %s70
    %p82 = scmp.eq.s32.totalorder %s18, 1
    %p83 = por %p81, %p82
    %p85 = scmp.ne.s32.totalorder %s70, %s84
    %p86 = scmp.eq.s32.totalorder %s18, 0
    %p87 = por %p85, %p86
    %s89 = sadd.s32 %s88, 1
    %p92 = scmp.eq.s32.totalorder %s12, 1
    %p93 = scmp.ne.s32.totalorder %s88, %s90
    %p94 = scmp.eq.s32.totalorder %s12, 0
    %p95 = por %p93, %p94
    %p96 = scmp.ne.s32.totalorder %s88, %s90
    %p97 = scmp.eq.s32.totalorder %s17, 1
    %p98 = por %p96, %p97
    %p99 = scmp.ne.s32.totalorder %s90, %s91
    %p100 = scmp.eq.s32.totalorder %s17, 0
    %p101 = por %p99, %p100
    %p102 = scmp.ne.s32.totalorder %s90, %s91
    %p103 = scmp.eq.s32.totalorder %s18, 1
    %p104 = por %p102, %p103
    %p106 = scmp.ne.s32.totalorder %s91, %s105
    %p107 = scmp.eq.s32.totalorder %s18, 0
    %p108 = por %p106, %p107
    %s110 = sadd.s32 %s109, 1
    %p113 = scmp.eq.s32.totalorder %s12, 1
    %p114 = scmp.ne.s32.totalorder %s109, %s111
    %p115 = scmp.eq.s32.totalorder %s12, 0
    %p116 = por %p114, %p115
    %p117 = scmp.ne.s32.totalorder %s109, %s111
    %p118 = scmp.eq.s32.totalorder %s17, 1
    %p119 = por %p117, %p118
    %p120 = scmp.ne.s32.totalorder %s111, %s112
    %p121 = scmp.eq.s32.totalorder %s17, 0
    %p122 = por %p120, %p121
    %p123 = scmp.ne.s32.totalorder %s111, %s112
    %p124 = scmp.eq.s32.totalorder %s18, 1
    %p125 = por %p123, %p124
    %p127 = scmp.ne.s32.totalorder %s112, %s126
    %p128 = scmp.eq.s32.totalorder %s18, 0
    %p129 = por %p127, %p128
    %s131 = sadd.s32 %s130, 1
    %p134 = scmp.eq.s32.totalorder %s12, 1
    %p135 = scmp.ne.s32.totalorder %s130, %s132
    %p136 = scmp.eq.s32.totalorder %s12, 0
    %p137 = por %p135, %p136
    %p138 = scmp.ne.s32.totalorder %s130, %s132
    %p139 = scmp.eq.s32.totalorder %s17, 1
    %p140 = por %p138, %p139
    %p141 = scmp.ne.s32.totalorder %s132, %s133
    %p142 = scmp.eq.s32.totalorder %s17, 0
    %p143 = por %p141, %p142
    %p144 = scmp.ne.s32.totalorder %s132, %s133
    %p145 = scmp.eq.s32.totalorder %s18, 1
    %p146 = por %p144, %p145
    %p148 = scmp.ne.s32.totalorder %s133, %s147
    %p149 = scmp.eq.s32.totalorder %s18, 0
    %p150 = por %p148, %p149
    %s151 = ssub.s32 %s12, %s19
    %p152 = scmp.eq.s32.totalorder %s151, 0
    %s154 = sadd.s32 %s153, 1
    %s155 = scalar_select %p152, %s153, %s154
    %p158 = pneg %p152
    %p159 = scmp.eq.s32.totalorder %s12, 1
    %p160 = por %p158, %p159
    %p161 = scmp.ne.s32.totalorder %s153, %s156
    %p162 = scmp.eq.s32.totalorder %s12, 0
    %p163 = por %p161, %p162
    %p164 = scmp.ne.s32.totalorder %s153, %s156
    %p165 = scmp.eq.s32.totalorder %s17, 1
    %p166 = por %p164, %p165
    %p167 = scmp.ne.s32.totalorder %s156, %s157
    %p168 = scmp.eq.s32.totalorder %s17, 0
    %p169 = por %p167, %p168
    %p170 = scmp.ne.s32.totalorder %s156, %s157
    %p171 = scmp.eq.s32.totalorder %s18, 1
    %p172 = por %p170, %p171
    %p174 = scmp.ne.s32.totalorder %s157, %s173
    %p175 = scmp.eq.s32.totalorder %s18, 0
    %p176 = por %p174, %p175
    %p177 = scmp.le.s32.totalorder 1, %s12
    %p178 = scmp.lt.s32.totalorder %s12, 3
    %p179 = pnand %p177, %p178
    %p180 = pneg %p179
    // Predicated region
    $region9: #{basic_block_forward.1} parent=5 // pred_check
      _
    $region10: #{basic_block_forward.1} parent=5 // pred_check_branch
      %182 = sbr.rel (%p179) target = $region12
    $region11: #{basic_block_forward.1} parent=5 // pred_region
      %s183 = ssub.s32 %s12, 1
      // Predicated region
      $region13: #{basic_block_forward.1} parent=11 // pred_check
        %p184 = pneg %p59
      $region14: #{basic_block_forward.1} parent=11 // pred_check_branch
        %186 = sbr.rel (%p184) target = $region16
      $region15: #{basic_block_forward.1} parent=11 // pred_region
        _
      $region16: #{basic_block_forward.1} parent=11 // pred_fallthru
        _
      // Predicated region
      $region17: #{basic_block_forward.1} parent=11 // pred_check
        %p187 = pneg %p80
      $region18: #{basic_block_forward.1} parent=11 // pred_check_branch
        %189 = sbr.rel (%p187) target = $region20
      $region19: #{basic_block_forward.1} parent=11 // pred_region
        _
      $region20: #{basic_block_forward.1} parent=11 // pred_fallthru
        _
      // Predicated region
      $region21: #{basic_block_forward.1} parent=11 // pred_check
        %p190 = pneg %p101
      $region22: #{basic_block_forward.1} parent=11 // pred_check_branch
        %192 = sbr.rel (%p190) target = $region24
      $region23: #{basic_block_forward.1} parent=11 // pred_region
        _
      $region24: #{basic_block_forward.1} parent=11 // pred_fallthru
        _
      // Predicated region
      $region25: #{basic_block_forward.1} parent=11 // pred_check
        %p193 = pneg %p122
      $region26: #{basic_block_forward.1} parent=11 // pred_check_branch
        %195 = sbr.rel (%p193) target = $region28
      $region27: #{basic_block_forward.1} parent=11 // pred_region
        _
      $region28: #{basic_block_forward.1} parent=11 // pred_fallthru
        _
      // Predicated region
      $region29: #{basic_block_forward.1} parent=11 // pred_check
        %p196 = pneg %p143
      $region30: #{basic_block_forward.1} parent=11 // pred_check_branch
        %198 = sbr.rel (%p196) target = $region32
      $region31: #{basic_block_forward.1} parent=11 // pred_region
        _
      $region32: #{basic_block_forward.1} parent=11 // pred_fallthru
        _
    $region12: #{basic_block_forward.1} parent=5 // pred_fallthru
      _
    %p199 = scmp.lt.s32.totalorder %s12, 2
    // Predicated region
    $region33: #{basic_block_forward.1} parent=5 // pred_check
      %p200 = pneg %p199
    $region34: #{basic_block_forward.1} parent=5 // pred_check_branch
      %202 = sbr.rel (%p200) target = $region36
    $region35: #{basic_block_forward.1} parent=5 // pred_region
      // Predicated region
      $region37: #{basic_block_forward.1} parent=35 // pred_check
        %p203 = pneg %p32
      $region38: #{basic_block_forward.1} parent=35 // pred_check_branch
        %205 = sbr.rel (%p203) target = $region40
      $region39: #{basic_block_forward.1} parent=35 // pred_region
        %p206 = scmp.lt.s32.totalorder %s12, 1
        %s207 = scalar_select %p206, %s12, 1
        %s208 = smul.addr %s207, 5
        %s209 = smul.addr %s208, 8
        %s210 = scalar_lea.vmem %s0, %s209
      $region40: #{basic_block_forward.1} parent=35 // pred_fallthru
        _
    $region36: #{basic_block_forward.1} parent=5 // pred_fallthru
      _
    %p211 = scmp.le.s32.totalorder 1, %s12
    %p212 = scmp.lt.s32.totalorder %s12, 3
    %p213 = pnand %p211, %p212
    %p214 = pneg %p213
    // Predicated region
    $region41: #{basic_block_forward.1} parent=5 // pred_check
      _
    $region42: #{basic_block_forward.1} parent=5 // pred_check_branch
      %216 = sbr.rel (%p213) target = $region44
    $region43: #{basic_block_forward.1} parent=5 // pred_region
      %s217 = ssub.s32 %s12, 1
      %p218 = scmp.lt.s32.totalorder %s17, 1
      %s219 = scalar_select %p218, %s17, 1
      %s220 = smul.addr %s219, 5
      %s221 = smul.addr %s220, 8
      %s222 = scalar_lea.vmem %s0, %s221
      %p223 = pneg %p38
      %p224 = pneg %p35
      %p225 = pneg %p59
      %p226 = pneg %p56
      %p227 = pneg %p80
      %p228 = pneg %p77
      %p229 = pneg %p101
      %p230 = pneg %p98
      %p231 = pneg %p122
      %p232 = pneg %p119
      %p233 = pneg %p143
      %p234 = pneg %p140
      %p235 = pneg %p169
      %p236 = pneg %p166
      %p237 = scmp.lt.s32.totalorder %s17, 1
      %s238 = scalar_select %p237, %s17, 1
      %s239 = smul.addr %s238, 2
      %s240 = smul.addr %s239, 8
      %s241 = scalar_lea.vmem %s6, %s240
      %p242 = scmp.lt.s32.totalorder %s17, 1
      %s243 = scalar_select %p242, %s17, 1
      %s244 = smul.addr %s243, 5
      %s245 = smul.addr %s244, 8
      %s246 = scalar_lea.vmem %s0, %s245
      %p247 = scmp.lt.s32.totalorder %s17, 1
      %s248 = scalar_select %p247, %s17, 1
      %s249 = smul.addr %s248, 2
      %s250 = smul.addr %s249, 8
      %s251 = scalar_lea.vmem %s6, %s250
      %v253 = vld [vmem:[%s246] sm:$0xff]
      %v254 = vld [vmem:[%s246 + $0x8] sm:$0xff]
      %v255 = vld [vmem:[%s246 + $0x10] sm:$0xff]
      %v256 = vld [vmem:[%s246 + $0x18] sm:$0xff]
      %261 = vrot.lane.b32.xlu0 %v253, 127
      %v262 = vpop.permute.xlu0 %261
      %263 = vrot.lane.b32.xlu0 %v254, 127
      %v264 = vpop.permute.xlu0 %263
      %265 = vrot.lane.b32.xlu0 %v255, 127
      %v266 = vpop.permute.xlu0 %265
      %267 = vrot.lane.b32.xlu0 %v256, 127
      %v268 = vpop.permute.xlu0 %267
      %vm269 = vcmask 1039360
      %v270 = vsel %vm269, %v262, %v264
      %v271 = vsel %vm269, %v264, %v266
      %v272 = vsel %vm269, %v266, %v268
      %277 = vrot.lane.b32.xlu0 %v253, 126
      %v278 = vpop.permute.xlu0 %277
      %279 = vrot.lane.b32.xlu0 %v254, 126
      %v280 = vpop.permute.xlu0 %279
      %281 = vrot.lane.b32.xlu0 %v255, 126
      %v282 = vpop.permute.xlu0 %281
      %283 = vrot.lane.b32.xlu0 %v256, 126
      %v284 = vpop.permute.xlu0 %283
      %vm285 = vcmask 1031168
      %v286 = vsel %vm285, %v278, %v280
      %v287 = vsel %vm285, %v280, %v282
      %v288 = vsel %vm285, %v282, %v284
      %293 = vrot.lane.b32.xlu0 %v253, 108
      %v294 = vpop.permute.xlu0 %293
      %295 = vrot.lane.b32.xlu0 %v254, 108
      %v296 = vpop.permute.xlu0 %295
      %297 = vrot.lane.b32.xlu0 %v255, 108
      %v298 = vpop.permute.xlu0 %297
      %299 = vrot.lane.b32.xlu0 %v256, 108
      %v300 = vpop.permute.xlu0 %299
      %vm301 = vcmask 883712
      %v302 = vsel %vm301, %v294, %v296
      %v303 = vsel %vm301, %v296, %v298
      %v304 = vsel %vm301, %v298, %v300
      %309 = vrot.lane.b32.xlu0 %v253, 107
      %v310 = vpop.permute.xlu0 %309
      %311 = vrot.lane.b32.xlu0 %v254, 107
      %v312 = vpop.permute.xlu0 %311
      %313 = vrot.lane.b32.xlu0 %v255, 107
      %v314 = vpop.permute.xlu0 %313
      %315 = vrot.lane.b32.xlu0 %v256, 107
      %v316 = vpop.permute.xlu0 %315
      %vm317 = vcmask 875520
      %v318 = vsel %vm317, %v310, %v312
      %v319 = vsel %vm317, %v312, %v314
      %v320 = vsel %vm317, %v314, %v316
      %325 = vrot.lane.b32.xlu0 %v253, 106
      %v326 = vpop.permute.xlu0 %325
      %327 = vrot.lane.b32.xlu0 %v254, 106
      %v328 = vpop.permute.xlu0 %327
      %329 = vrot.lane.b32.xlu0 %v255, 106
      %v330 = vpop.permute.xlu0 %329
      %331 = vrot.lane.b32.xlu0 %v256, 106
      %v332 = vpop.permute.xlu0 %331
      %vm333 = vcmask 867328
      %v334 = vsel %vm333, %v326, %v328
      %v335 = vsel %vm333, %v328, %v330
      %v336 = vsel %vm333, %v330, %v332
      %341 = vrot.lane.b32.xlu0 %v253, 88
      %v342 = vpop.permute.xlu0 %341
      %343 = vrot.lane.b32.xlu0 %v254, 88
      %v344 = vpop.permute.xlu0 %343
      %345 = vrot.lane.b32.xlu0 %v255, 88
      %v346 = vpop.permute.xlu0 %345
      %347 = vrot.lane.b32.xlu0 %v256, 88
      %v348 = vpop.permute.xlu0 %347
      %vm349 = vcmask 719872
      %v350 = vsel %vm349, %v342, %v344
      %v351 = vsel %vm349, %v344, %v346
      %v352 = vsel %vm349, %v346, %v348
      %357 = vrot.lane.b32.xlu0 %v253, 87
      %v358 = vpop.permute.xlu0 %357
      %359 = vrot.lane.b32.xlu0 %v254, 87
      %v360 = vpop.permute.xlu0 %359
      %361 = vrot.lane.b32.xlu0 %v255, 87
      %v362 = vpop.permute.xlu0 %361
      %363 = vrot.lane.b32.xlu0 %v256, 87
      %v364 = vpop.permute.xlu0 %363
      %vm365 = vcmask 711680
      %v366 = vsel %vm365, %v358, %v360
      %v367 = vsel %vm365, %v360, %v362
      %v368 = vsel %vm365, %v362, %v364
      %373 = vrot.lane.b32.xlu0 %v253, 86
      %v374 = vpop.permute.xlu0 %373
      %375 = vrot.lane.b32.xlu0 %v254, 86
      %v376 = vpop.permute.xlu0 %375
      %377 = vrot.lane.b32.xlu0 %v255, 86
      %v378 = vpop.permute.xlu0 %377
      %379 = vrot.lane.b32.xlu0 %v256, 86
      %v380 = vpop.permute.xlu0 %379
      %vm381 = vcmask 703488
      %v382 = vsel %vm381, %v374, %v376
      %v383 = vsel %vm381, %v376, %v378
      %v384 = vsel %vm381, %v378, %v380
      %v389 = vld [vmem:[%s2] sm:$0xf]
      %v390 = vld [vmem:[%s2 + $0x4] sm:$0xf]
      %v391 = vpack.c.bf16 %v270, %v253
      %v392 = vpack.c.bf16 %v271, %v254
      %v393 = vpack.c.bf16 %v272, %v255
      %v394 = vpack.c.bf16 %v268, %v256
      %v395 = vpack.c.bf16 %v302, %v286
      %v396 = vpack.c.bf16 %v303, %v287
      %v397 = vpack.c.bf16 %v304, %v288
      %v398 = vpack.c.bf16 %v300, %v284
      %v399 = vpack.c.bf16 %v334, %v318
      %v400 = vpack.c.bf16 %v335, %v319
      %v401 = vpack.c.bf16 %v336, %v320
      %v402 = vpack.c.bf16 %v332, %v316
      %v403 = vpack.c.bf16 %v366, %v350
      %v404 = vpack.c.bf16 %v367, %v351
      %v405 = vpack.c.bf16 %v368, %v352
      %v406 = vpack.c.bf16 %v364, %v348
      %v407 = vpack.c.bf16 %v382, %v382
      %v408 = vpack.c.bf16 %v383, %v383
      %v409 = vpack.c.bf16 %v384, %v384
      %v410 = vpack.c.bf16 %v380, %v380
      %v411 = vld [vmem:[%s3] sm:$0xff]
      %v412 = vld [vmem:[%s3 + $0x8] sm:$0xff]
      %414 = vset.pattern.permute.xlu0 0
      %415 = vperm.xlu0 %414, %v411
      %v416 = vpop.permute.xlu0 %415
      %419 = vset.pattern.permute.xlu0 0
      %420 = vperm.xlu0 %419, %v412
      %v421 = vpop.permute.xlu0 %420
      %v425 = vunpack.c.l.b16 %v389
      %v426 = vunpack.c.l.b16 %v390
      %v427 = vpack.c.b16 %v426, %v425
      %448 = vrot.lane.b32.xlu0 %v391, 110
      %v449 = vpop.permute.xlu0 %448
      %450 = vrot.lane.b32.xlu0 %v392, 110
      %v451 = vpop.permute.xlu0 %450
      %452 = vrot.lane.b32.xlu0 %v393, 110
      %v453 = vpop.permute.xlu0 %452
      %454 = vrot.lane.b32.xlu0 %v394, 110
      %v455 = vpop.permute.xlu0 %454
      %456 = vrot.lane.b32.xlu0 %v395, 110
      %v457 = vpop.permute.xlu0 %456
      %458 = vrot.lane.b32.xlu0 %v396, 110
      %v459 = vpop.permute.xlu0 %458
      %460 = vrot.lane.b32.xlu0 %v397, 110
      %v461 = vpop.permute.xlu0 %460
      %462 = vrot.lane.b32.xlu0 %v398, 110
      %v463 = vpop.permute.xlu0 %462
      %464 = vrot.lane.b32.xlu0 %v399, 110
      %v465 = vpop.permute.xlu0 %464
      %466 = vrot.lane.b32.xlu0 %v400, 110
      %v467 = vpop.permute.xlu0 %466
      %468 = vrot.lane.b32.xlu0 %v401, 110
      %v469 = vpop.permute.xlu0 %468
      %470 = vrot.lane.b32.xlu0 %v402, 110
      %v471 = vpop.permute.xlu0 %470
      %472 = vrot.lane.b32.xlu0 %v403, 110
      %v473 = vpop.permute.xlu0 %472
      %474 = vrot.lane.b32.xlu0 %v404, 110
      %v475 = vpop.permute.xlu0 %474
      %476 = vrot.lane.b32.xlu0 %v405, 110
      %v477 = vpop.permute.xlu0 %476
      %478 = vrot.lane.b32.xlu0 %v406, 110
      %v479 = vpop.permute.xlu0 %478
      %480 = vrot.lane.b32.xlu0 %v407, 110
      %v481 = vpop.permute.xlu0 %480
      %482 = vrot.lane.b32.xlu0 %v408, 110
      %v483 = vpop.permute.xlu0 %482
      %484 = vrot.lane.b32.xlu0 %v409, 110
      %v485 = vpop.permute.xlu0 %484
      %486 = vrot.lane.b32.xlu0 %v410, 110
      %v487 = vpop.permute.xlu0 %486
      %vm488 = vcmask 900096
      %v489 = vsel %vm488, %v449, %v451
      %v490 = vsel %vm488, %v451, %v453
      %v491 = vsel %vm488, %v453, %v455
      %v492 = vsel %vm488, %v457, %v459
      %v493 = vsel %vm488, %v459, %v461
      %v494 = vsel %vm488, %v461, %v463
      %v495 = vsel %vm488, %v465, %v467
      %v496 = vsel %vm488, %v467, %v469
      %v497 = vsel %vm488, %v469, %v471
      %v498 = vsel %vm488, %v473, %v475
      %v499 = vsel %vm488, %v475, %v477
      %v500 = vsel %vm488, %v477, %v479
      %v501 = vsel %vm488, %v481, %v483
      %v502 = vsel %vm488, %v483, %v485
      %v503 = vsel %vm488, %v485, %v487
      %vm520 = vcmask 588800
      %v522 = vsel %vm520, %v427, 0
      %vm524 = vcmask 1043456
      %v526 = vsel %vm524, %v501, 0
      %v529 = vsel %vm524, %v502, 0
      %v532 = vsel %vm524, %v503, 0
      %v535 = vsel %vm524, %v487, 0
      %537 = vmatprep.subr.bf16.mxu0 %v490
      %538 = vmatpush1.bf16.msra.mxu0 %v489
      %539 = vmatprep.subr.bf16.mxu0 %v493
      %540 = vmatpush1.bf16.msra.mxu0 %v492
      %541 = vmatprep.subr.bf16.mxu0 %v496
      %542 = vmatpush1.bf16.msra.mxu0 %v495
      %543 = vmatprep.subr.bf16.mxu0 %v499
      %544 = vmatpush1.bf16.msra.mxu0 %v498
      %545 = vmatprep.subr.bf16.mxu0 %v529
      %546 = vmatpush1.bf16.msra.mxu0 %v526
      %547 = vmatprep.subr.bf16.mxu0 0
      %548 = vmatpush1.bf16.msra.mxu0 0
      %549 = vmatprep.subr.bf16.mxu0 0
      %550 = vmatpush1.bf16.msra.mxu0 0
      %551 = vmatprep.subr.bf16.mxu0 0
      %552 = vmatpush1.bf16.msra.mxu0 0
      %553 = vmatprep.subr.bf16.mxu0 0
      %554 = vmatpush1.bf16.msra.mxu0 0
      %555 = vmatprep.subr.bf16.mxu0 0
      %556 = vmatpush1.bf16.msra.mxu0 0
      %557 = vmatprep.subr.bf16.mxu0 0
      %558 = vmatpush1.bf16.msra.mxu0 0
      %559 = vmatprep.subr.bf16.mxu0 0
      %560 = vmatpush1.bf16.msra.mxu0 0
      %561 = vmatprep.subr.bf16.mxu0 0
      %562 = vmatpush1.bf16.msra.mxu0 0
      %563 = vmatprep.subr.bf16.mxu0 0
      %564 = vmatpush1.bf16.msra.mxu0 0
      %565 = vmatprep.subr.bf16.mxu0 0
      %566 = vmatpush1.bf16.msra.mxu0 0
      %567 = vmatprep.subr.bf16.mxu0 0
      %568 = vmatpush1.bf16.msra.mxu0 0
      %569 = vmatprep.mubr.bf16.mxu0 0
      %570 = vmatmul.mubr.bf16.gmra.mrb[0].mxu0 %v522
      %v571 = vpop.f32.mrb[0].mxu0
      %v572 = vadd.f32 %v416, %v571
      %v573 = vpop.f32.mrb[0].mxu0
      %v574 = vadd.f32 %v416, %v573
      %v575 = vpop.f32.mrb[0].mxu0
      %v576 = vadd.f32 %v421, %v575
      %v577 = vpop.f32.mrb[0].mxu0
      %v578 = vadd.f32 %v421, %v577
      %579 = vdwg.mxu0
      %580 = vmatprep.subr.bf16.mxu0 %v455
      %581 = vmatpush1.bf16.msra.mxu0 %v491
      %582 = vmatprep.subr.bf16.mxu0 %v463
      %583 = vmatpush1.bf16.msra.mxu0 %v494
      %584 = vmatprep.subr.bf16.mxu0 %v471
      %585 = vmatpush1.bf16.msra.mxu0 %v497
      %586 = vmatprep.subr.bf16.mxu0 %v479
      %587 = vmatpush1.bf16.msra.mxu0 %v500
      %588 = vmatprep.subr.bf16.mxu0 %v535
      %589 = vmatpush1.bf16.msra.mxu0 %v532
      %590 = vmatprep.subr.bf16.mxu0 0
      %591 = vmatpush1.bf16.msra.mxu0 0
      %592 = vmatprep.subr.bf16.mxu0 0
      %593 = vmatpush1.bf16.msra.mxu0 0
      %594 = vmatprep.subr.bf16.mxu0 0
      %595 = vmatpush1.bf16.msra.mxu0 0
      %596 = vmatprep.subr.bf16.mxu0 0
      %597 = vmatpush1.bf16.msra.mxu0 0
      %598 = vmatprep.subr.bf16.mxu0 0
      %599 = vmatpush1.bf16.msra.mxu0 0
      %600 = vmatprep.subr.bf16.mxu0 0
      %601 = vmatpush1.bf16.msra.mxu0 0
      %602 = vmatprep.subr.bf16.mxu0 0
      %603 = vmatpush1.bf16.msra.mxu0 0
      %604 = vmatprep.subr.bf16.mxu0 0
      %605 = vmatpush1.bf16.msra.mxu0 0
      %606 = vmatprep.subr.bf16.mxu0 0
      %607 = vmatpush1.bf16.msra.mxu0 0
      %608 = vmatprep.subr.bf16.mxu0 0
      %609 = vmatpush1.bf16.msra.mxu0 0
      %610 = vmatprep.subr.bf16.mxu0 0
      %611 = vmatpush1.bf16.msra.mxu0 0
      %612 = vmatprep.mubr.bf16.mxu0 0
      %613 = vmatmul.mubr.bf16.gmra.mrb[0].mxu0 %v522
      %v614 = vpop.f32.mrb[0].mxu0
      %v615 = vadd.f32 %v416, %v614
      %v616 = vpop.f32.mrb[0].mxu0
      %v617 = vadd.f32 %v416, %v616
      %v618 = vpop.f32.mrb[0].mxu0
      %v619 = vadd.f32 %v421, %v618
      %v620 = vpop.f32.mrb[0].mxu0
      %v621 = vadd.f32 %v421, %v620
      %622 = vdwg.mxu0
      %v623 = vmax.f32 %v572, 0.0
      %v624 = vmax.f32 %v574, 0.0
      %v625 = vmax.f32 %v615, 0.0
      %v626 = vmax.f32 %v617, 0.0
      %v627 = vmax.f32 %v576, 0.0
      %v628 = vmax.f32 %v578, 0.0
      %v629 = vmax.f32 %v619, 0.0
      %v630 = vmax.f32 %v621, 0.0
      %v631 = vld [vmem:[%s1] sm:$0xf]
      %v633 = vlaneseq
      %v634 = vshrl.u32 %v633, 7
      %v635 = vsub.s32 0, %v634
      %v636 = vrot.slane %v631, %v635
      %v637 = vlaneseq
      %v638 = vshrl.u32 %v637, 7
      %v639 = vsub.s32 1, %v638
      %v640 = vrot.slane %v631, %v639
      %v641 = vlaneseq
      %v642 = vshrl.u32 %v641, 7
      %v643 = vsub.s32 2, %v642
      %v644 = vrot.slane %v631, %v643
      %v645 = vlaneseq
      %v646 = vshrl.u32 %v645, 7
      %v647 = vsub.s32 3, %v646
      %v648 = vrot.slane %v631, %v647
      %v653 = vmul.f32 %v623, %v636
      %v654 = vmul.f32 %v624, %v640
      %v655 = vmul.f32 %v625, %v644
      %v656 = vmul.f32 %v626, %v648
      %v657 = vmul.f32 %v627, %v636
      %v658 = vmul.f32 %v628, %v640
      %v659 = vmul.f32 %v629, %v644
      %v660 = vmul.f32 %v630, %v648
      %669 = vrot.lane.b32.xlu0 %v653, 127
      %v670 = vpop.permute.xlu0 %669
      %671 = vrot.lane.b32.xlu0 %v654, 127
      %v672 = vpop.permute.xlu0 %671
      %673 = vrot.lane.b32.xlu0 %v655, 127
      %v674 = vpop.permute.xlu0 %673
      %675 = vrot.lane.b32.xlu0 %v656, 127
      %v676 = vpop.permute.xlu0 %675
      %677 = vrot.lane.b32.xlu0 %v657, 127
      %v678 = vpop.permute.xlu0 %677
      %679 = vrot.lane.b32.xlu0 %v658, 127
      %v680 = vpop.permute.xlu0 %679
      %681 = vrot.lane.b32.xlu0 %v659, 127
      %v682 = vpop.permute.xlu0 %681
      %683 = vrot.lane.b32.xlu0 %v660, 127
      %v684 = vpop.permute.xlu0 %683
      %v685 = vsel %vm269, %v670, %v672
      %v686 = vsel %vm269, %v672, %v674
      %v687 = vsel %vm269, %v674, %v676
      %v688 = vsel %vm269, %v678, %v680
      %v689 = vsel %vm269, %v680, %v682
      %v690 = vsel %vm269, %v682, %v684
      %699 = vrot.lane.b32.xlu0 %v653, 126
      %v700 = vpop.permute.xlu0 %699
      %701 = vrot.lane.b32.xlu0 %v654, 126
      %v702 = vpop.permute.xlu0 %701
      %703 = vrot.lane.b32.xlu0 %v655, 126
      %v704 = vpop.permute.xlu0 %703
      %705 = vrot.lane.b32.xlu0 %v656, 126
      %v706 = vpop.permute.xlu0 %705
      %707 = vrot.lane.b32.xlu0 %v657, 126
      %v708 = vpop.permute.xlu0 %707
      %709 = vrot.lane.b32.xlu0 %v658, 126
      %v710 = vpop.permute.xlu0 %709
      %711 = vrot.lane.b32.xlu0 %v659, 126
      %v712 = vpop.permute.xlu0 %711
      %713 = vrot.lane.b32.xlu0 %v660, 126
      %v714 = vpop.permute.xlu0 %713
      %v715 = vsel %vm285, %v700, %v702
      %v716 = vsel %vm285, %v702, %v704
      %v717 = vsel %vm285, %v704, %v706
      %v718 = vsel %vm285, %v708, %v710
      %v719 = vsel %vm285, %v710, %v712
      %v720 = vsel %vm285, %v712, %v714
      %729 = vrot.lane.b32.xlu0 %v653, 108
      %v730 = vpop.permute.xlu0 %729
      %731 = vrot.lane.b32.xlu0 %v654, 108
      %v732 = vpop.permute.xlu0 %731
      %733 = vrot.lane.b32.xlu0 %v655, 108
      %v734 = vpop.permute.xlu0 %733
      %735 = vrot.lane.b32.xlu0 %v656, 108
      %v736 = vpop.permute.xlu0 %735
      %737 = vrot.lane.b32.xlu0 %v657, 108
      %v738 = vpop.permute.xlu0 %737
      %739 = vrot.lane.b32.xlu0 %v658, 108
      %v740 = vpop.permute.xlu0 %739
      %741 = vrot.lane.b32.xlu0 %v659, 108
      %v742 = vpop.permute.xlu0 %741
      %743 = vrot.lane.b32.xlu0 %v660, 108
      %v744 = vpop.permute.xlu0 %743
      %v745 = vsel %vm301, %v730, %v732
      %v746 = vsel %vm301, %v732, %v734
      %v747 = vsel %vm301, %v734, %v736
      %v748 = vsel %vm301, %v738, %v740
      %v749 = vsel %vm301, %v740, %v742
      %v750 = vsel %vm301, %v742, %v744
      %759 = vrot.lane.b32.xlu0 %v653, 107
      %v760 = vpop.permute.xlu0 %759
      %761 = vrot.lane.b32.xlu0 %v654, 107
      %v762 = vpop.permute.xlu0 %761
      %763 = vrot.lane.b32.xlu0 %v655, 107
      %v764 = vpop.permute.xlu0 %763
      %765 = vrot.lane.b32.xlu0 %v656, 107
      %v766 = vpop.permute.xlu0 %765
      %767 = vrot.lane.b32.xlu0 %v657, 107
      %v768 = vpop.permute.xlu0 %767
      %769 = vrot.lane.b32.xlu0 %v658, 107
      %v770 = vpop.permute.xlu0 %769
      %771 = vrot.lane.b32.xlu0 %v659, 107
      %v772 = vpop.permute.xlu0 %771
      %773 = vrot.lane.b32.xlu0 %v660, 107
      %v774 = vpop.permute.xlu0 %773
      %v775 = vsel %vm317, %v760, %v762
      %v776 = vsel %vm317, %v762, %v764
      %v777 = vsel %vm317, %v764, %v766
      %v778 = vsel %vm317, %v768, %v770
      %v779 = vsel %vm317, %v770, %v772
      %v780 = vsel %vm317, %v772, %v774
      %789 = vrot.lane.b32.xlu0 %v653, 106
      %v790 = vpop.permute.xlu0 %789
      %791 = vrot.lane.b32.xlu0 %v654, 106
      %v792 = vpop.permute.xlu0 %791
      %793 = vrot.lane.b32.xlu0 %v655, 106
      %v794 = vpop.permute.xlu0 %793
      %795 = vrot.lane.b32.xlu0 %v656, 106
      %v796 = vpop.permute.xlu0 %795
      %797 = vrot.lane.b32.xlu0 %v657, 106
      %v798 = vpop.permute.xlu0 %797
      %799 = vrot.lane.b32.xlu0 %v658, 106
      %v800 = vpop.permute.xlu0 %799
      %801 = vrot.lane.b32.xlu0 %v659, 106
      %v802 = vpop.permute.xlu0 %801
      %803 = vrot.lane.b32.xlu0 %v660, 106
      %v804 = vpop.permute.xlu0 %803
      %v805 = vsel %vm333, %v790, %v792
      %v806 = vsel %vm333, %v792, %v794
      %v807 = vsel %vm333, %v794, %v796
      %v808 = vsel %vm333, %v798, %v800
      %v809 = vsel %vm333, %v800, %v802
      %v810 = vsel %vm333, %v802, %v804
      %819 = vrot.lane.b32.xlu0 %v653, 88
      %v820 = vpop.permute.xlu0 %819
      %821 = vrot.lane.b32.xlu0 %v654, 88
      %v822 = vpop.permute.xlu0 %821
      %823 = vrot.lane.b32.xlu0 %v655, 88
      %v824 = vpop.permute.xlu0 %823
      %825 = vrot.lane.b32.xlu0 %v656, 88
      %v826 = vpop.permute.xlu0 %825
      %827 = vrot.lane.b32.xlu0 %v657, 88
      %v828 = vpop.permute.xlu0 %827
      %829 = vrot.lane.b32.xlu0 %v658, 88
      %v830 = vpop.permute.xlu0 %829
      %831 = vrot.lane.b32.xlu0 %v659, 88
      %v832 = vpop.permute.xlu0 %831
      %833 = vrot.lane.b32.xlu0 %v660, 88
      %v834 = vpop.permute.xlu0 %833
      %v835 = vsel %vm349, %v820, %v822
      %v836 = vsel %vm349, %v822, %v824
      %v837 = vsel %vm349, %v824, %v826
      %v838 = vsel %vm349, %v828, %v830
      %v839 = vsel %vm349, %v830, %v832
      %v840 = vsel %vm349, %v832, %v834
      %849 = vrot.lane.b32.xlu0 %v653, 87
      %v850 = vpop.permute.xlu0 %849
      %851 = vrot.lane.b32.xlu0 %v654, 87
      %v852 = vpop.permute.xlu0 %851
      %853 = vrot.lane.b32.xlu0 %v655, 87
      %v854 = vpop.permute.xlu0 %853
      %855 = vrot.lane.b32.xlu0 %v656, 87
      %v856 = vpop.permute.xlu0 %855
      %857 = vrot.lane.b32.xlu0 %v657, 87
      %v858 = vpop.permute.xlu0 %857
      %859 = vrot.lane.b32.xlu0 %v658, 87
      %v860 = vpop.permute.xlu0 %859
      %861 = vrot.lane.b32.xlu0 %v659, 87
      %v862 = vpop.permute.xlu0 %861
      %863 = vrot.lane.b32.xlu0 %v660, 87
      %v864 = vpop.permute.xlu0 %863
      %v865 = vsel %vm365, %v850, %v852
      %v866 = vsel %vm365, %v852, %v854
      %v867 = vsel %vm365, %v854, %v856
      %v868 = vsel %vm365, %v858, %v860
      %v869 = vsel %vm365, %v860, %v862
      %v870 = vsel %vm365, %v862, %v864
      %879 = vrot.lane.b32.xlu0 %v653, 86
      %v880 = vpop.permute.xlu0 %879
      %881 = vrot.lane.b32.xlu0 %v654, 86
      %v882 = vpop.permute.xlu0 %881
      %883 = vrot.lane.b32.xlu0 %v655, 86
      %v884 = vpop.permute.xlu0 %883
      %885 = vrot.lane.b32.xlu0 %v656, 86
      %v886 = vpop.permute.xlu0 %885
      %887 = vrot.lane.b32.xlu0 %v657, 86
      %v888 = vpop.permute.xlu0 %887
      %889 = vrot.lane.b32.xlu0 %v658, 86
      %v890 = vpop.permute.xlu0 %889
      %891 = vrot.lane.b32.xlu0 %v659, 86
      %v892 = vpop.permute.xlu0 %891
      %893 = vrot.lane.b32.xlu0 %v660, 86
      %v894 = vpop.permute.xlu0 %893
      %v895 = vsel %vm381, %v880, %v882
      %v896 = vsel %vm381, %v882, %v884
      %v897 = vsel %vm381, %v884, %v886
      %v898 = vsel %vm381, %v888, %v890
      %v899 = vsel %vm381, %v890, %v892
      %v900 = vsel %vm381, %v892, %v894
      %v909 = vld [vmem:[%s4] sm:$0xff]
      %v910 = vpack.c.bf16 %v657, %v653
      %v911 = vpack.c.bf16 %v658, %v654
      %v912 = vpack.c.bf16 %v659, %v655
      %v913 = vpack.c.bf16 %v660, %v656
      %v914 = vpack.c.bf16 %v688, %v685
      %v915 = vpack.c.bf16 %v689, %v686
      %v916 = vpack.c.bf16 %v690, %v687
      %v917 = vpack.c.bf16 %v684, %v676
      %v918 = vpack.c.bf16 %v718, %v715
      %v919 = vpack.c.bf16 %v719, %v716
      %v920 = vpack.c.bf16 %v720, %v717
      %v921 = vpack.c.bf16 %v714, %v706
      %v922 = vpack.c.bf16 %v748, %v745
      %v923 = vpack.c.bf16 %v749, %v746
      %v924 = vpack.c.bf16 %v750, %v747
      %v925 = vpack.c.bf16 %v744, %v736
      %v926 = vpack.c.bf16 %v778, %v775
      %v927 = vpack.c.bf16 %v779, %v776
      %v928 = vpack.c.bf16 %v780, %v777
      %v929 = vpack.c.bf16 %v774, %v766
      %v930 = vpack.c.bf16 %v808, %v805
      %v931 = vpack.c.bf16 %v809, %v806
      %v932 = vpack.c.bf16 %v810, %v807
      %v933 = vpack.c.bf16 %v804, %v796
      %v934 = vpack.c.bf16 %v838, %v835
      %v935 = vpack.c.bf16 %v839, %v836
      %v936 = vpack.c.bf16 %v840, %v837
      %v937 = vpack.c.bf16 %v834, %v826
      %v938 = vpack.c.bf16 %v868, %v865
      %v939 = vpack.c.bf16 %v869, %v866
      %v940 = vpack.c.bf16 %v870, %v867
      %v941 = vpack.c.bf16 %v864, %v856
      %v942 = vpack.c.bf16 %v898, %v895
      %v943 = vpack.c.bf16 %v899, %v896
      %v944 = vpack.c.bf16 %v900, %v897
      %v945 = vpack.c.bf16 %v894, %v886
      %v946 = vld [vmem:[%s5] sm:$0xff]
      %948 = vset.pattern.permute.xlu0 0
      %949 = vperm.xlu0 %948, %v946
      %v950 = vpop.permute.xlu0 %949
      %v953 = vunpack.c.l.b16 %v909
      %v954 = vunpack.c.h.b16 %v909
      %v955 = vpack.c.b16 %v953, %v953
      %v956 = vpack.c.b16 %v954, %v954
      %vm958 = vcmask 130048
      %v960 = vsel %vm958, %v956, 0
      %962 = vmatprep.subr.bf16.mxu0 %v911
      %963 = vmatpush1.bf16.msra.mxu0 %v910
      %964 = vmatprep.subr.bf16.mxu0 %v915
      %965 = vmatpush1.bf16.msra.mxu0 %v914
      %966 = vmatprep.subr.bf16.mxu0 %v919
      %967 = vmatpush1.bf16.msra.mxu0 %v918
      %968 = vmatprep.subr.bf16.mxu0 %v923
      %969 = vmatpush1.bf16.msra.mxu0 %v922
      %970 = vmatprep.subr.bf16.mxu0 %v927
      %971 = vmatpush1.bf16.msra.mxu0 %v926
      %972 = vmatprep.subr.bf16.mxu0 %v931
      %973 = vmatpush1.bf16.msra.mxu0 %v930
      %974 = vmatprep.subr.bf16.mxu0 %v935
      %975 = vmatpush1.bf16.msra.mxu0 %v934
      %976 = vmatprep.subr.bf16.mxu0 %v939
      %977 = vmatpush1.bf16.msra.mxu0 %v938
      %978 = vmatprep.subr.bf16.mxu0 %v943
      %979 = vmatpush1.bf16.msra.mxu0 %v942
      %980 = vmatprep.subr.bf16.mxu0 0
      %981 = vmatpush1.bf16.msra.mxu0 0
      %982 = vmatprep.subr.bf16.mxu0 0
      %983 = vmatpush1.bf16.msra.mxu0 0
      %984 = vmatprep.subr.bf16.mxu0 0
      %985 = vmatpush1.bf16.msra.mxu0 0
      %986 = vmatprep.subr.bf16.mxu0 0
      %987 = vmatpush1.bf16.msra.mxu0 0
      %988 = vmatprep.subr.bf16.mxu0 0
      %989 = vmatpush1.bf16.msra.mxu0 0
      %990 = vmatprep.subr.bf16.mxu0 0
      %991 = vmatpush1.bf16.msra.mxu0 0
      %992 = vmatprep.subr.bf16.mxu0 0
      %993 = vmatpush1.bf16.msra.mxu0 0
      %994 = vmatprep.mubr.bf16.mxu0 %v960
      %995 = vmatmul.mubr.bf16.gmra.mrb[0].mxu0 %v955
      %v996 = vpop.f32.mrb[0].mxu0
      %v997 = vadd.f32 %v950, %v996
      %v998 = vpop.f32.mrb[0].mxu0
      %v999 = vadd.f32 %v950, %v998
      %v1000 = vpop.f32.mrb[0].mxu0
      %v1001 = vpop.f32.mrb[0].mxu0
      %1002 = vdwg.mxu0
      %1003 = vmatprep.subr.bf16.mxu0 %v913
      %1004 = vmatpush1.bf16.msra.mxu0 %v912
      %1005 = vmatprep.subr.bf16.mxu0 %v917
      %1006 = vmatpush1.bf16.msra.mxu0 %v916
      %1007 = vmatprep.subr.bf16.mxu0 %v921
      %1008 = vmatpush1.bf16.msra.mxu0 %v920
      %1009 = vmatprep.subr.bf16.mxu0 %v925
      %1010 = vmatpush1.bf16.msra.mxu0 %v924
      %1011 = vmatprep.subr.bf16.mxu0 %v929
      %1012 = vmatpush1.bf16.msra.mxu0 %v928
      %1013 = vmatprep.subr.bf16.mxu0 %v933
      %1014 = vmatpush1.bf16.msra.mxu0 %v932
      %1015 = vmatprep.subr.bf16.mxu0 %v937
      %1016 = vmatpush1.bf16.msra.mxu0 %v936
      %1017 = vmatprep.subr.bf16.mxu0 %v941
      %1018 = vmatpush1.bf16.msra.mxu0 %v940
      %1019 = vmatprep.subr.bf16.mxu0 %v945
      %1020 = vmatpush1.bf16.msra.mxu0 %v944
      %1021 = vmatprep.subr.bf16.mxu0 0
      %1022 = vmatpush1.bf16.msra.mxu0 0
      %1023 = vmatprep.subr.bf16.mxu0 0
      %1024 = vmatpush1.bf16.msra.mxu0 0
      %1025 = vmatprep.subr.bf16.mxu0 0
      %1026 = vmatpush1.bf16.msra.mxu0 0
      %1027 = vmatprep.subr.bf16.mxu0 0
      %1028 = vmatpush1.bf16.msra.mxu0 0
      %1029 = vmatprep.subr.bf16.mxu0 0
      %1030 = vmatpush1.bf16.msra.mxu0 0
      %1031 = vmatprep.subr.bf16.mxu0 0
      %1032 = vmatpush1.bf16.msra.mxu0 0
      %1033 = vmatprep.subr.bf16.mxu0 0
      %1034 = vmatpush1.bf16.msra.mxu0 0
      %1035 = vmatprep.mubr.bf16.mxu0 %v960
      %1036 = vmatmul.mubr.bf16.gmra.mrb[0].mxu0 %v955
      %v1037 = vpop.f32.mrb[0].mxu0
      %v1038 = vadd.f32 %v950, %v1037
      %v1039 = vpop.f32.mrb[0].mxu0
      %v1040 = vpop.f32.mrb[0].mxu0
      %v1041 = vpop.f32.mrb[0].mxu0
      %1042 = vdwg.mxu0
      %1043 = vrot.lane.b32.xlu0 %v253, 68
      %v1044 = vpop.permute.xlu0 %1043
      %1045 = vrot.lane.b32.xlu0 %v254, 68
      %v1046 = vpop.permute.xlu0 %1045
      %1047 = vrot.lane.b32.xlu0 %v255, 68
      %v1048 = vpop.permute.xlu0 %1047
      %1049 = vrot.lane.b32.xlu0 %v256, 68
      %v1050 = vpop.permute.xlu0 %1049
      %vm1051 = vcmask 556032
      %v1052 = vsel %vm1051, %v1044, %v1046
      %v1053 = vsel %vm1051, %v1046, %v1048
      %v1054 = vsel %vm1051, %v1048, %v1050
      %v1058 = vadd.f32 %v997, %v1052
      %v1059 = vadd.f32 %v999, %v1053
      %v1060 = vadd.f32 %v1038, %v1054
      %v1061 = vmax.f32 %v1058, 0.0
      %v1062 = vmax.f32 %v1059, 0.0
      %v1063 = vmax.f32 %v1060, 0.0
      %1065 = vrot.lane.b32.xlu0 %v1061, 86
      %v1066 = vpop.permute.xlu0 %1065
      %1068 = vrot.lane.b32.xlu0 %v1061, 82
      %v1069 = vpop.permute.xlu0 %1068
      %1071 = vrot.lane.b32.xlu0 %v1061, 78
      %v1072 = vpop.permute.xlu0 %1071
      %1074 = vrot.lane.b32.xlu0 %v1061, 74
      %v1075 = vpop.permute.xlu0 %1074
      %1078 = vrot.lane.b32.xlu0 %v1061, 70
      %v1079 = vpop.permute.xlu0 %1078
      %1080 = vrot.lane.b32.xlu0 %v1062, 70
      %v1081 = vpop.permute.xlu0 %1080
      %vm1082 = vcmask 572416
      %v1083 = vsel %vm1082, %v1079, %v1081
      %1085 = vrot.lane.b32.xlu0 %v1062, 66
      %v1086 = vpop.permute.xlu0 %1085
      %1088 = vrot.lane.b32.xlu0 %v1062, 62
      %v1089 = vpop.permute.xlu0 %1088
      %1091 = vrot.lane.b32.xlu0 %v1062, 58
      %v1092 = vpop.permute.xlu0 %1091
      %1094 = vrot.lane.b32.xlu0 %v1062, 54
      %v1095 = vpop.permute.xlu0 %1094
      %1097 = vrot.lane.b32.xlu0 %v1062, 50
      %v1098 = vpop.permute.xlu0 %1097
      %1101 = vrot.lane.b32.xlu0 %v1062, 46
      %v1102 = vpop.permute.xlu0 %1101
      %1103 = vrot.lane.b32.xlu0 %v1063, 46
      %v1104 = vpop.permute.xlu0 %1103
      %vm1105 = vcmask 375808
      %v1106 = vsel %vm1105, %v1102, %v1104
      %1108 = vrot.lane.b32.xlu0 %v1063, 42
      %v1109 = vpop.permute.xlu0 %1108
      %1111 = vrot.lane.b32.xlu0 %v1063, 38
      %v1112 = vpop.permute.xlu0 %1111
      %1114 = vrot.lane.b32.xlu0 %v1063, 34
      %v1115 = vpop.permute.xlu0 %1114
      %1117 = vrot.lane.b32.xlu0 %v1063, 30
      %v1118 = vpop.permute.xlu0 %1117
      %1120 = vrot.lane.b32.xlu0 %v1063, 26
      %v1121 = vpop.permute.xlu0 %1120
      %v1123 = vsel %vm958, %v1066, %v1069
      %vm1124 = vcmask 261120
      %v1125 = vsel %vm1124, %v1123, %v1072
      %vm1126 = vcmask 392192
      %v1127 = vsel %vm1126, %v1125, %v1075
      %vm1128 = vcmask 523264
      %v1129 = vsel %vm1128, %v1127, %v1083
      %vm1130 = vcmask 654336
      %v1131 = vsel %vm1130, %v1129, %v1086
      %vm1132 = vcmask 785408
      %v1133 = vsel %vm1132, %v1131, %v1089
      %vm1134 = vcmask 916480
      %v1135 = vsel %vm1134, %v1133, %v1092
      %v1136 = vsel %vm958, %v1095, %v1098
      %v1137 = vsel %vm1124, %v1136, %v1106
      %v1138 = vsel %vm1126, %v1137, %v1109
      %v1139 = vsel %vm1128, %v1138, %v1112
      %v1140 = vsel %vm1130, %v1139, %v1115
      %v1141 = vsel %vm1132, %v1140, %v1118
      %v1142 = vsel %vm1134, %v1141, %v1121
      %1143 = vst [vmem:[%s251] sm:$0xff] %v1135
      %1144 = vst [vmem:[%s251 + $0x8] sm:$0xff] %v1142
      %p1145 = scmp.lt.s32.totalorder %s17, 1
      %s1146 = scalar_select %p1145, %s17, 1
      %s1147 = smul.addr %s1146, 2
      %s1148 = smul.addr %s1147, 8
      %s1149 = scalar_lea.vmem %s6, %s1148
      // Predicated region
      $region45: #{basic_block_forward.1} parent=43 // pred_check
        %p1150 = pneg %p166
      $region46: #{basic_block_forward.1} parent=43 // pred_check_branch
        %1152 = sbr.rel (%p1150) target = $region48
      $region47: #{basic_block_forward.1} parent=43 // pred_region
        _
      $region48: #{basic_block_forward.1} parent=43 // pred_fallthru
        _
    $region44: #{basic_block_forward.1} parent=5 // pred_fallthru
      _
    %p1153 = scmp.le.s32.totalorder 2, %s12
    // Predicated region
    $region49: #{basic_block_forward.1} parent=5 // pred_check
      %p1154 = pneg %p1153
    $region50: #{basic_block_forward.1} parent=5 // pred_check_branch
      %1156 = sbr.rel (%p1154) target = $region52
    $region51: #{basic_block_forward.1} parent=5 // pred_region
      %s1157 = ssub.s32 %s12, 2
      // Predicated region
      $region53: #{basic_block_forward.1} parent=51 // pred_check
        %p1158 = pneg %p172
      $region54: #{basic_block_forward.1} parent=51 // pred_check_branch
        %1160 = sbr.rel (%p1158) target = $region56
      $region55: #{basic_block_forward.1} parent=51 // pred_region
        %p1161 = scmp.lt.s32.totalorder %s18, 1
        %s1162 = scalar_select %p1161, %s18, 1
        %s1163 = smul.addr %s1162, 2
        %s1164 = smul.addr %s1163, 8
        %s1165 = scalar_lea.vmem %s6, %s1164
      $region56: #{basic_block_forward.1} parent=51 // pred_fallthru
        _
    $region52: #{basic_block_forward.1} parent=5 // pred_fallthru
      _
  $region6: #{basic_block_forward.1} parent=0 // loop_footer
    %s16 = sadd.s32 1, %s12
  $region7: #{basic_block_forward.1} parent=0 // loop_footer_branch
    %11 = sbr.rel target = $region3
  $region8: #{basic_block_forward.1} parent=0 // loop_exit
    _

</llo_original>
